<compile_context>
chip_gen: v6e
topology: v6e:2x2x1
jax: 0.10.0
libtpu: 0.0.40
codegen_flags: <defaults>
</compile_context>

<pallas_src>
import jax
import jax.numpy as jnp
from jax.experimental import pallas as pl
from jax.experimental.pallas import tpu as pltpu


def _sig_t_kernel(w_ref, out_ref):
    tm, C = out_ref.shape
    # Global row index of each element in this tile (row tiling along axis 0).
    row0 = pl.program_id(0) * tm
    rows = row0 + jax.lax.broadcasted_iota(jnp.int32, (tm, C), 0)
    cols = jax.lax.broadcasted_iota(jnp.int32, (tm, C), 1)
    diag = rows == cols

    # sigmoid(x) == 0.5 * tanh(0.5 * x) + 0.5 : single EUP push per element.
    x = w_ref[...]
    sig = 0.5 * jnp.tanh(0.5 * x) + 0.5

    # T = I + sigmoid(w) * co  ==  1 on the diagonal, sigmoid(w) elsewhere.
    # Stage T through the output buffer (no extra tile-sized VMEM temp).
    out_ref[...] = jnp.where(diag, jnp.float32(1.0), sig)

    # F.normalize(p=1, dim=1): every entry >= 0 and the diagonal contributes 1,
    # so sum(|row|) == sum(row) >= 1 and the 1e-12 clamp can never fire.
    row_sum = jnp.sum(out_ref[...], axis=1, keepdims=True)
    # Keep approx=False: the EUP approximate reciprocal (~1e-3 rel. error)
    # would break the row-sum == 1 invariant.
    out_ref[...] = out_ref[...] * pl.reciprocal(row_sum, approx=False)


def _vmem_plan():
    """Return (vmem_limit_bytes, tile_budget_bytes) for this TPU generation."""
    try:
        cap = int(pltpu.get_tpu_info().vmem_capacity_bytes)
    except Exception:  # conservative default (v7x per-TC size)
        cap = 64 * 1024 * 1024
    # Scoped-VMEM limit we request from the compiler (leave headroom for the
    # compiler's own scratch): ~96 MiB on v5e/v6e (128 MiB physical),
    # ~48 MiB on v7x (64 MiB physical).
    vmem_limit = min((cap * 3) // 4, 100 * 1024 * 1024)
    # Bytes available for the pipelined buffers: in + out, double-buffered.
    tile_budget = (vmem_limit * 3) // 4
    return vmem_limit, tile_budget


def _choose_row_tile(C, tile_budget, itemsize=4):
    """Pick a sublane-aligned row tile TM for lane-dense (TM, C) blocks."""
    if C < 128:
        # Tiny problem: a single full-array block; (C, C) == full dims
        # satisfies the (8, 128) tiling rules.
        return C
    row_bytes = C * itemsize
    # 2 buffers (input) + 2 buffers (output) live per pipeline step.
    tm_budget = max(8, tile_budget // (4 * row_bytes))
    # Keep >= 4 grid steps so DMA pipelines and both v7x TCs get work.
    tm_steps = pl.cdiv(C, 4)
    tm = min(tm_budget, tm_steps, C)
    tm = max(8, (tm // 8) * 8)  # sublane alignment
    return tm


def sig_t_forward(w):
    """Run the sig_t forward pass. w is the (C, C) float32 parameter."""
    C = w.shape[0]
    assert w.shape == (C, C)
    w = w.astype(jnp.float32)

    vmem_limit, tile_budget = _vmem_plan()
    tm = _choose_row_tile(C, tile_budget)
    grid = (pl.cdiv(C, tm),)
    spec = pl.BlockSpec((tm, C), lambda i: (i, 0))

    return pl.pallas_call(
        _sig_t_kernel,
        out_shape=jax.ShapeDtypeStruct((C, C), jnp.float32),
        grid=grid,
        in_specs=[spec],
        out_specs=spec,
        compiler_params=pltpu.CompilerParams(
            dimension_semantics=("parallel",),
            vmem_limit_bytes=int(vmem_limit),
        ),
    )(w)


def make_sig_t_param(n_class, init=2.0):
    """Deterministic parameter construction mirroring sig_t.__init__."""
    return -init * jnp.ones((n_class, n_class), dtype=jnp.float32)


def _reference(w):
    """Pure-JAX mirror of the PyTorch forward (incl. the redundant abs/clamp)."""
    C = w.shape[0]
    identity = jnp.eye(C, dtype=jnp.float32)
    co = jnp.ones((C, C), dtype=jnp.float32) - identity
    sig = jax.nn.sigmoid(w)
    T = identity + sig * co
    denom = jnp.maximum(jnp.sum(jnp.abs(T), axis=1, keepdims=True), 1e-12)
    return T / denom


if __name__ == "__main__":
    n_class = 16  # small shape consistent with args.n_class

    # Case 1: the deterministic __init__ parameter (-init * ones).
    w0 = make_sig_t_param(n_class, init=2.0)
    T0 = jax.block_until_ready(sig_t_forward(w0))
    T0_ref = _reference(w0)
    assert T0.shape == (n_class, n_class)
    assert jnp.allclose(T0, T0_ref, atol=1e-6, rtol=1e-6)
    assert jnp.allclose(jnp.sum(T0, axis=1), jnp.ones((n_class,)), atol=1e-5)

    # Case 2: a trained-looking parameter, deterministic via PRNGKey(0).
    key = jax.random.PRNGKey(0)
    w1 = -2.0 + 0.5 * jax.random.normal(key, (n_class, n_class), dtype=jnp.float32)
    T1 = jax.block_until_ready(sig_t_forward(w1))
    T1_ref = _reference(w1)
    assert jnp.allclose(T1, T1_ref, atol=1e-6, rtol=1e-6)
    assert jnp.allclose(jnp.sum(T1, axis=1), jnp.ones((n_class,)), atol=1e-5)

    print("KERNEL_OK")
</pallas_src>

<mosaic_0001>
module attributes {stable_mosaic.version = 11 : i64} {
  func.func @_sig_t_kernel(%arg0: i32, %arg1: memref<16x16xf32, #tpu.memory_space<vmem>>, %arg2: memref<16x16xf32, #tpu.memory_space<vmem>>) attributes {dimension_semantics = [#tpu.dimension_semantics<parallel>], iteration_bounds = array<i64: 1>, scalar_prefetch = 0 : i64, scratch_operands = 0 : i64, tpu.core_type = #tpu.core_type<tc>, window_params = [{transform_indices = @transform_0, window_bounds = array<i64: 16, 16>}, {transform_indices = @transform_1, window_bounds = array<i64: 16, 16>}]} {
    %c16_i32 = arith.constant 16 : i32
    %0 = arith.muli %arg0, %c16_i32 : i32
    %1 = tpu.iota {dimensions = array<i32: 0>} : vector<16x16xi32>
    %2 = vector.broadcast %0 : i32 to vector<16x16xi32>
    %3 = arith.addi %2, %1 : vector<16x16xi32>
    %4 = tpu.iota {dimensions = array<i32: 1>} : vector<16x16xi32>
    %5 = arith.cmpi eq, %3, %4 : vector<16x16xi32>
    %c0 = arith.constant 0 : index
    %c0_0 = arith.constant 0 : index
    %6 = vector.load %arg1[%c0, %c0_0] : memref<16x16xf32, #tpu.memory_space<vmem>>, vector<16x16xf32>
    %cst = arith.constant 5.000000e-01 : f32
    %7 = vector.broadcast %cst : f32 to vector<16x16xf32>
    %8 = arith.mulf %7, %6 : vector<16x16xf32>
    %9 = math.tanh %8 : vector<16x16xf32>
    %cst_1 = arith.constant 5.000000e-01 : f32
    %10 = vector.broadcast %cst_1 : f32 to vector<16x16xf32>
    %11 = arith.mulf %10, %9 : vector<16x16xf32>
    %cst_2 = arith.constant 5.000000e-01 : f32
    %12 = vector.broadcast %cst_2 : f32 to vector<16x16xf32>
    %13 = arith.addf %11, %12 : vector<16x16xf32>
    %cst_3 = arith.constant 1.000000e+00 : f32
    %14 = vector.broadcast %cst_3 : f32 to vector<16x16xf32>
    %15 = arith.select %5, %14, %13 : vector<16x16xi1>, vector<16x16xf32>
    %c0_4 = arith.constant 0 : index
    %c0_5 = arith.constant 0 : index
    %16 = vector.load %arg2[%c0_4, %c0_5] : memref<16x16xf32, #tpu.memory_space<vmem>>, vector<16x16xf32>
    tpu.vector_store %arg2[%c0_4, %c0_5], %15 {strides = array<i32>} : memref<16x16xf32, #tpu.memory_space<vmem>>, vector<16x16xf32>,
    %c0_6 = arith.constant 0 : index
    %c0_7 = arith.constant 0 : index
    %17 = vector.load %arg2[%c0_6, %c0_7] : memref<16x16xf32, #tpu.memory_space<vmem>>, vector<16x16xf32>
    %cst_8 = arith.constant dense<0.000000e+00> : vector<16xf32>
    %18 = vector.multi_reduction <add>, %17, %cst_8 [1] : vector<16x16xf32> to vector<16xf32>
    %19 = vector.shape_cast %18 : vector<16xf32> to vector<16x1xf32>
    %c0_9 = arith.constant 0 : index
    %c0_10 = arith.constant 0 : index
    %20 = vector.load %arg2[%c0_9, %c0_10] : memref<16x16xf32, #tpu.memory_space<vmem>>, vector<16x16xf32>
    %21 = tpu.reciprocal %19 : vector<16x1xf32> -> vector<16x1xf32>
    %22 = vector.broadcast %21 : vector<16x1xf32> to vector<16x16xf32>
    %23 = arith.mulf %20, %22 : vector<16x16xf32>
    %c0_11 = arith.constant 0 : index
    %c0_12 = arith.constant 0 : index
    %24 = vector.load %arg2[%c0_11, %c0_12] : memref<16x16xf32, #tpu.memory_space<vmem>>, vector<16x16xf32>
    tpu.vector_store %arg2[%c0_11, %c0_12], %23 {strides = array<i32>} : memref<16x16xf32, #tpu.memory_space<vmem>>, vector<16x16xf32>,
    return
  }
  func.func @transform_0(%arg0: i32) -> (i32, i32) {
    %c0_i32 = arith.constant 0 : i32
    %c0_i32_0 = arith.constant 0 : i32
    return %arg0, %c0_i32 : i32, i32
  }
  func.func @transform_1(%arg0: i32) -> (i32, i32) {
    %c0_i32 = arith.constant 0 : i32
    %c0_i32_0 = arith.constant 0 : i32
    return %arg0, %c0_i32 : i32, i32
  }
}

</mosaic_0001>

<llo_original>
// kernel: tpu_custom_call.1
$region0: #{tpu_custom_call.1}
  #allocation0 [shape = 'u32[]', space=smem, size = 0x4, offset = 0x4, fixed_abs, tag = 'smem constant byte address 0x4 - core index']
  #allocation1 [shape = 'u32[144,128]{1,0:T(1,128)}', space=vmem, size = 0x12000, scoped, tag = 'internal scratch']
  %s0 = inlined_call_operand.hbm [shape: f32[16,16], index: 0, kind: input, shape index: {}]
  %s1 = inlined_call_operand.hbm [shape: f32[16,16], index: 1, kind: output, shape index: {}]
  %s2 = sld [smem:[#allocation0]]
  $region18: #{tpu_custom_call.1} parent=0
    _
  %s4 = ssub.s32 1, %s2
  %s5 = scalar_select 0, %s4, %s2
  $region1: #{tpu_custom_call.1} parent=0
    #allocation2 [shape = 'u8[8192]{0}', space=vmem, size = 0x2000, scoped, tag = 'input window, operand 0, single buffered']
    #allocation3 [shape = 's32[1]{0}', space=sflag, size = 0x4, scoped, tag = 'scoped memory for tpu_custom_call.1']
    #allocation4 [shape = 's32[1]{0}', space=sflag, size = 0x4, scoped, tag = 'scoped memory for tpu_custom_call.1']
    #allocation5 [shape = 'u8[8192]{0}', space=vmem, size = 0x2000, scoped, tag = 'output window, operand 0, single buffered']
    %6 = vsyncpa [#allocation3], 0
    %7 = vsyncpa [#allocation4], 0
    // Predicated region
    $region2: #{tpu_custom_call.1} parent=1 // pred_check
      _
    $region3: #{tpu_custom_call.1} parent=1 // pred_check_branch
      %9 = sbr.rel (0) target = $region5
    $region4: #{tpu_custom_call.1} parent=1 // pred_region
      %s11 = ssub.s32 256, 256
      %12 = vsyncadd [#allocation3], %s11
      %s13 = sshll.u32 [#allocation2], 4
      %s14 = int_to_ptr.vmem [resolvable:$true] %s13
      %19 = dma.hbm_to_vmem [thread:$0]  %s0, 256, %s14, [#allocation3], 128, 128, 8
    $region5: #{tpu_custom_call.1} parent=1 // pred_fallthru
      _
    // Predicated region
    $region6: #{tpu_custom_call.1} parent=1 // pred_check
      _
    $region7: #{tpu_custom_call.1} parent=1 // pred_check_branch
      %21 = sbr.rel (0) target = $region9
    $region8: #{tpu_custom_call.1} parent=1 // pred_region
      %22 = dma.done [#allocation3], 256
    $region9: #{tpu_custom_call.1} parent=1 // pred_fallthru
      _
    %s23 = smul.u32 0, 16
    %v24 = vlaneseq
    %v25 = vshrl.u32 %v24, 7
    %v26 = vadd.s32 %v25, 8
    %v27 = vstv %s23
    %v28 = vadd.s32 %v27, %v25
    %v29 = vadd.s32 %v27, %v26
    %v30 = vlaneseq
    %v31 = vand.u32 %v30, 127
    %vm32 = vcmp.eq.s32.totalorder %v28, %v31
    %vm33 = vcmp.eq.s32.totalorder %v29, %v31
    %v34 = vld [vmem:[#allocation2] sm:$0xff]
    %v35 = vld [vmem:[#allocation2 + $0x8] sm:$0xff]
    %v36 = vmul.f32 %v34, 0.5
    %v37 = vmul.f32 %v35, 0.5
    %v38 = vtanh.pop %v36
    %v39 = vtanh.pop %v37
    %v40 = vmul.f32 %v38, 0.5
    %v41 = vmul.f32 %v39, 0.5
    %v42 = vadd.f32 %v40, 0.5
    %v43 = vadd.f32 %v41, 0.5
    %v44 = vsel %vm32, 1.0, %v42
    %v45 = vsel %vm33, 1.0, %v43
    %vm46 = vcmask 130048
    %47 = vst.msk [vmem:[#allocation5] sm:$0xff] %vm46, %v44
    %48 = vst.msk [vmem:[#allocation5 + $0x8] sm:$0xff] %vm46, %v45
    %v49 = vld [vmem:[#allocation5] sm:$0xff]
    %v50 = vld [vmem:[#allocation5 + $0x8] sm:$0xff]
    %v51 = vsel %vm46, %v49, 0.0
    %52 = vadd.xlane.f32.xlu0 %v51
    %v53 = vpop.xlane.xlu0 %52
    %v54 = vsel %vm46, %v50, 0.0
    %55 = vadd.xlane.f32.xlu0 %v54
    %v56 = vpop.xlane.xlu0 %55
    %v57 = vrcp.pop %v53
    %v58 = vrcp.pop %v56
    %v59 = vmul.f32 %v49, %v57
    %v60 = vmul.f32 %v50, %v58
    %61 = vst.msk [vmem:[#allocation5] sm:$0xff] %vm46, %v59
    %62 = vst.msk [vmem:[#allocation5 + $0x8] sm:$0xff] %vm46, %v60
    // Predicated region
    $region10: #{tpu_custom_call.1} parent=1 // pred_check
      _
    $region11: #{tpu_custom_call.1} parent=1 // pred_check_branch
      %64 = sbr.rel (0) target = $region13
    $region12: #{tpu_custom_call.1} parent=1 // pred_region
      %s66 = ssub.s32 256, 256
      %67 = vsyncadd [#allocation4], %s66
      %s68 = sshll.u32 [#allocation5], 4
      %s69 = int_to_ptr.vmem [resolvable:$true] %s68
      %74 = dma.vmem_to_hbm [thread:$0]  %s69, 256, %s1, [#allocation4], 128, 128, 8
    $region13: #{tpu_custom_call.1} parent=1 // pred_fallthru
      _
    // Predicated region
    $region14: #{tpu_custom_call.1} parent=1 // pred_check
      _
    $region15: #{tpu_custom_call.1} parent=1 // pred_check_branch
      %76 = sbr.rel (0) target = $region17
    $region16: #{tpu_custom_call.1} parent=1 // pred_region
      %77 = dma.done [#allocation4], 256
    $region17: #{tpu_custom_call.1} parent=1 // pred_fallthru
      _
    %78 = vsyncpa [#allocation3], 1
    %79 = vsyncpa [#allocation4], 1

</llo_original>
